<compile_context>
chip_gen: v5e
topology: v5e:2x2
jax: 0.10.0
libtpu: 0.0.40
codegen_flags: <defaults>
</compile_context>

<pallas_src>
import functools

import jax
import jax.numpy as jnp
from jax.experimental import pallas as pl
from jax.experimental.pallas import tpu as pltpu


def _bahdanau_kernel(seq_len, enc_ref, dec_ref, w1t_ref, b1_ref, w2t_ref,
                     b2_ref, v_ref, ctx_ref, aw_ref):
    # enc_ref : [TB, Sp, Hp] compute dtype (bf16 / f32)   -- streamed
    # dec_ref : [TB, Hp]     compute dtype                -- streamed
    # w1t_ref : [Hp, Hp]     compute dtype                -- resident
    # b1_ref  : [1, Hp]      f32                          -- resident
    # w2t_ref : [Hp, Hp]     compute dtype                -- resident
    # b2_ref  : [1, Hp]      f32                          -- resident
    # v_ref   : [1, Hp]      f32                          -- resident
    enc = enc_ref[...]
    tb, s_pad, h_pad = enc.shape

    # W1(dec_hidden) + b1 : [TB, Hp] x [Hp, Hp] MXU matmul, f32 accumulate.
    dproj = jnp.dot(dec_ref[...], w1t_ref[...],
                    preferred_element_type=jnp.float32) + b1_ref[...]

    # W2(enc) + b2 : one well-shaped [TB*Sp, Hp] x [Hp, Hp] MXU matmul.
    # Sp is padded to the sublane pack so the flatten / unflatten is free.
    proj = jnp.dot(enc.reshape(tb * s_pad, h_pad), w2t_ref[...],
                   preferred_element_type=jnp.float32)
    proj = (proj + b2_ref[...]).reshape(tb, s_pad, h_pad)

    # tanh(W1(dec)[:, None, :] + W2(enc)) -- all-f32 elementwise (v5e-safe).
    t = jnp.tanh(proj + dproj[:, None, :])                 # [TB, Sp, Hp] f32

    # V projection: VPU multiply + lane reduce (no N=1 MXU matmul).
    # The V bias is a constant shift under the softmax -> omitted.
    score = jnp.sum(t * v_ref[...], axis=-1)               # [TB, Sp] f32

    # Mask padded sequence positions before the softmax.
    if s_pad != seq_len:
        pos = jax.lax.broadcasted_iota(jnp.int32, (tb, s_pad), 1)
        score = jnp.where(pos < seq_len, score, jnp.float32(-1e30))

    # Softmax over the (lane) sequence axis -- exact normalization.
    m = jnp.max(score, axis=-1, keepdims=True)
    e = jnp.exp(score - m)
    aw = e / jnp.sum(e, axis=-1, keepdims=True)            # [TB, Sp] f32

    # context = sum_s aw * enc : VPU multiply + sublane reduce (avoids
    # weight-load-dominated M=1 batched MXU matmuls).
    ctx = jnp.sum(aw[:, :, None] * enc, axis=1)            # [TB, Hp] f32

    ctx_ref[...] = ctx.astype(ctx_ref.dtype)
    aw_ref[...] = aw.astype(aw_ref.dtype)


def _round_up(x, m):
    return (x + m - 1) // m * m


def _vmem_capacity_bytes():
    try:
        return int(pltpu.get_tpu_info().vmem_capacity_bytes)
    except Exception:
        return 64 * 1024 * 1024  # conservative (v7x per-TensorCore VMEM)


def _pick_batch_tile(batch, seq_pad, hid_pad, enc_itemsize, vmem_capacity):
    """Batch tile: fill a generation-aware VMEM budget with the streamed enc
    block + its f32 intermediates, but keep >= 2 grid steps when the batch
    allows so v7x's two TensorCores both get work."""
    # ~1/4 of physical VMEM, clamped to [8 MiB, 24 MiB]
    # (v7x 64 MiB -> 16 MiB; v5e/v6e 128 MiB -> 24 MiB).
    budget = int(min(max(vmem_capacity // 4, 8 * 1024 * 1024),
                     24 * 1024 * 1024))
    # per batch row: 2x enc buffers (double-buffered) + ~4 f32 [S,H] temps.
    per_row = seq_pad * hid_pad * (2 * enc_itemsize + 4 * 4)
    tb = max(8, (budget // max(per_row, 1)) // 8 * 8)
    if batch > 8:  # keep at least 2 grid steps (megacore sharding on v7x)
        half = _round_up((batch + 1) // 2, 8)
        tb = min(tb, half)
    tb = min(tb, _round_up(batch, 8))
    return int(tb)


def _resident_spec(block_shape, index_map, single_buffer):
    """Constant-index (resident) operand: single-buffer it when large so the
    weight footprint is not doubled (matters under v7x's 64 MiB VMEM)."""
    if single_buffer:
        try:
            return pl.BlockSpec(block_shape, index_map,
                                pipeline_mode=pl.Buffered(1))
        except Exception:  # older jax without pipeline_mode: fall back
            pass
    return pl.BlockSpec(block_shape, index_map)


@functools.partial(jax.jit, static_argnames=("compute_dtype",))
def bahdanau_attention(encoder_outputs, decoder_hidden, params,
                       compute_dtype=jnp.bfloat16):
    """encoder_outputs: [B, S, H] f32, decoder_hidden: [B, H] f32.
    Returns (context [B, H] f32, attention_weights [B, S] f32)."""
    B, S, H = encoder_outputs.shape
    w1, b1, w2, b2, v, bv = params
    del bv  # constant shift before softmax: no effect on attn / context

    cdt = jnp.dtype(compute_dtype)
    sublane = 16 if cdt.itemsize < 4 else 8
    S_pad = _round_up(S, sublane)          # free flatten for the W2 matmul
    H_pad = _round_up(H, 128)              # lane-dense MXU shapes / stores

    vmem_cap = _vmem_capacity_bytes()
    tb = _pick_batch_tile(B, S_pad, H_pad, cdt.itemsize, vmem_cap)
    B_pad = _round_up(B, tb)
    grid = (B_pad // tb,)
    vmem_limit = int(min(max(vmem_cap * 7 // 8, 32 * 1024 * 1024),
                         112 * 1024 * 1024))

    # Zero padding is neutral: padded H contributes 0 to the score (v is
    # zero there), padded S is masked in-kernel, padded B rows are sliced off.
    enc_c = jnp.zeros((B_pad, S_pad, H_pad), cdt).at[:B, :S, :H].set(
        encoder_outputs.astype(cdt))
    dec_c = jnp.zeros((B_pad, H_pad), cdt).at[:B, :H].set(
        decoder_hidden.astype(cdt))
    w1t_c = jnp.zeros((H_pad, H_pad), cdt).at[:H, :H].set(w1.T.astype(cdt))
    w2t_c = jnp.zeros((H_pad, H_pad), cdt).at[:H, :H].set(w2.T.astype(cdt))
    b1_r = jnp.zeros((1, H_pad), jnp.float32).at[0, :H].set(
        b1.astype(jnp.float32))
    b2_r = jnp.zeros((1, H_pad), jnp.float32).at[0, :H].set(
        b2.astype(jnp.float32))
    v_r = jnp.zeros((1, H_pad), jnp.float32).at[0, :H].set(
        v.reshape(-1).astype(jnp.float32))

    # Single-buffer resident weights only when their footprint is significant.
    single_buf = (H_pad * H_pad * cdt.itemsize) >= (1 << 20)

    cost = pl.CostEstimate(
        flops=(2 * B_pad * S_pad * H_pad * H_pad      # W2 matmul
               + 2 * B_pad * H_pad * H_pad            # W1 matmul
               + 6 * B_pad * S_pad * H_pad),          # adds / V / context
        transcendentals=B_pad * S_pad * H_pad + B_pad * S_pad,
        bytes_accessed=(enc_c.size * cdt.itemsize
                        + dec_c.size * cdt.itemsize
                        + 2 * H_pad * H_pad * cdt.itemsize
                        + 3 * H_pad * 4
                        + B_pad * (H_pad + S_pad) * 4),
    )

    ctx_p, aw_p = pl.pallas_call(
        functools.partial(_bahdanau_kernel, S),
        grid=grid,
        in_specs=[
            pl.BlockSpec((tb, S_pad, H_pad), lambda i: (i, 0, 0)),   # enc
            pl.BlockSpec((tb, H_pad), lambda i: (i, 0)),             # dec
            _resident_spec((H_pad, H_pad), lambda i: (0, 0), single_buf),  # W1^T
            _resident_spec((1, H_pad), lambda i: (0, 0), False),           # b1
            _resident_spec((H_pad, H_pad), lambda i: (0, 0), single_buf),  # W2^T
            _resident_spec((1, H_pad), lambda i: (0, 0), False),           # b2
            _resident_spec((1, H_pad), lambda i: (0, 0), False),           # v
        ],
        out_specs=(
            pl.BlockSpec((tb, H_pad), lambda i: (i, 0)),             # context
            pl.BlockSpec((tb, S_pad), lambda i: (i, 0)),             # attn
        ),
        out_shape=(
            jax.ShapeDtypeStruct((B_pad, H_pad), jnp.float32),
            jax.ShapeDtypeStruct((B_pad, S_pad), jnp.float32),
        ),
        compiler_params=pltpu.CompilerParams(
            dimension_semantics=("parallel",),   # batch tiles -> v7x 2 TCs
            vmem_limit_bytes=vmem_limit,
        ),
        cost_estimate=cost,
    )(enc_c, dec_c, w1t_c, b1_r, w2t_c, b2_r, v_r)

    return ctx_p[:B, :H], aw_p[:B, :S]


def reference(encoder_outputs, decoder_hidden, params):
    """Pure-JAX reference replicating the PyTorch forward exactly."""
    w1, b1, w2, b2, v, bv = params
    B, S, H = encoder_outputs.shape
    dec = jnp.repeat(decoder_hidden[:, None, :], S, axis=1)        # [B, S, H]
    pre = jnp.tanh(dec @ w1.T + b1 + encoder_outputs @ w2.T + b2)  # [B, S, H]
    score = pre @ v.T + bv                                         # [B, S, 1]
    aw = jax.nn.softmax(score, axis=1)[:, :, 0]                    # [B, S]
    ctx = jnp.einsum('bs,bsh->bh', aw, encoder_outputs)            # [B, H]
    return ctx, aw


def init_params(key, hidden_size):
    k1, k2, k3, k4, k5, k6 = jax.random.split(key, 6)
    scale = 1.0 / jnp.sqrt(hidden_size)
    w1 = jax.random.uniform(k1, (hidden_size, hidden_size), jnp.float32, -scale, scale)
    b1 = jax.random.uniform(k2, (hidden_size,), jnp.float32, -scale, scale)
    w2 = jax.random.uniform(k3, (hidden_size, hidden_size), jnp.float32, -scale, scale)
    b2 = jax.random.uniform(k4, (hidden_size,), jnp.float32, -scale, scale)
    v = jax.random.uniform(k5, (1, hidden_size), jnp.float32, -scale, scale)
    bv = jax.random.uniform(k6, (1,), jnp.float32, -scale, scale)
    return (w1, b1, w2, b2, v, bv)


if __name__ == "__main__":
    B, S, H = 2, 8, 32
    key = jax.random.PRNGKey(0)
    k_enc, k_dec, k_par = jax.random.split(key, 3)
    encoder_outputs = jax.random.normal(k_enc, (B, S, H), jnp.float32)
    decoder_hidden = jax.random.normal(k_dec, (B, H), jnp.float32)
    params = init_params(k_par, H)

    ctx_ref, aw_ref = reference(encoder_outputs, decoder_hidden, params)

    # Default path: bf16 MXU operands on every generation (elementwise f32).
    ctx, aw = bahdanau_attention(encoder_outputs, decoder_hidden, params)
    ctx = jax.block_until_ready(ctx)
    aw = jax.block_until_ready(aw)
    assert ctx.shape == (B, H) and aw.shape == (B, S)
    assert jnp.allclose(ctx, ctx_ref, atol=5e-2, rtol=5e-2)
    assert jnp.allclose(aw, aw_ref, atol=5e-2, rtol=5e-2)
    assert jnp.allclose(jnp.sum(aw, axis=1), 1.0, atol=1e-5)

    # f32 path: exact-arithmetic check (exact softmax normalization now).
    ctx_f, aw_f = bahdanau_attention(encoder_outputs, decoder_hidden, params,
                                     compute_dtype=jnp.float32)
    ctx_f = jax.block_until_ready(ctx_f)
    aw_f = jax.block_until_ready(aw_f)
    assert jnp.allclose(ctx_f, ctx_ref, atol=1e-4, rtol=1e-4)
    assert jnp.allclose(aw_f, aw_ref, atol=1e-4, rtol=1e-4)
    assert jnp.allclose(jnp.sum(aw_f, axis=1), 1.0, atol=1e-5)

    print("KERNEL_OK")
</pallas_src>

<mosaic_0001>
module attributes {stable_mosaic.version = 11 : i64} {
  func.func @_bahdanau_kernel(%arg0: i32, %arg1: memref<8x16x128xbf16, #tpu.memory_space<vmem>>, %arg2: memref<8x128xbf16, #tpu.memory_space<vmem>>, %arg3: memref<128x128xbf16, #tpu.memory_space<vmem>>, %arg4: memref<1x128xf32, #tpu.memory_space<vmem>>, %arg5: memref<128x128xbf16, #tpu.memory_space<vmem>>, %arg6: memref<1x128xf32, #tpu.memory_space<vmem>>, %arg7: memref<1x128xf32, #tpu.memory_space<vmem>>, %arg8: memref<8x128xf32, #tpu.memory_space<vmem>>, %arg9: memref<8x16xf32, #tpu.memory_space<vmem>>) attributes {dimension_semantics = [#tpu.dimension_semantics<parallel>], iteration_bounds = array<i64: 1>, scalar_prefetch = 0 : i64, scratch_operands = 0 : i64, tpu.core_type = #tpu.core_type<tc>, window_params = [{transform_indices = @transform_0, window_bounds = array<i64: 8, 16, 128>}, {transform_indices = @transform_1, window_bounds = array<i64: 8, 128>}, {pipeline_mode = #tpu.pipeline_mode<synchronous>, transform_indices = @transform_2, window_bounds = array<i64: 128, 128>}, {pipeline_mode = #tpu.pipeline_mode<synchronous>, transform_indices = @transform_3, window_bounds = array<i64: 1, 128>}, {pipeline_mode = #tpu.pipeline_mode<synchronous>, transform_indices = @transform_4, window_bounds = array<i64: 128, 128>}, {pipeline_mode = #tpu.pipeline_mode<synchronous>, transform_indices = @transform_5, window_bounds = array<i64: 1, 128>}, {pipeline_mode = #tpu.pipeline_mode<synchronous>, transform_indices = @transform_6, window_bounds = array<i64: 1, 128>}, {transform_indices = @transform_7, window_bounds = array<i64: 8, 128>}, {transform_indices = @transform_8, window_bounds = array<i64: 8, 16>}]} {
    %c0 = arith.constant 0 : index
    %c0_0 = arith.constant 0 : index
    %c0_1 = arith.constant 0 : index
    %0 = vector.load %arg1[%c0, %c0_0, %c0_1] : memref<8x16x128xbf16, #tpu.memory_space<vmem>>, vector<8x16x128xbf16>
    %c0_2 = arith.constant 0 : index
    %c0_3 = arith.constant 0 : index
    %1 = vector.load %arg2[%c0_2, %c0_3] : memref<8x128xbf16, #tpu.memory_space<vmem>>, vector<8x128xbf16>
    %c0_4 = arith.constant 0 : index
    %c0_5 = arith.constant 0 : index
    %2 = vector.load %arg3[%c0_4, %c0_5] : memref<128x128xbf16, #tpu.memory_space<vmem>>, vector<128x128xbf16>
    %cst = arith.constant dense<0.000000e+00> : vector<8x128xf32>
    %3 = tpu.matmul %1, %2, %cst {dimension_numbers = #tpu.dot_dimension_numbers<[1], [0], [0], [1], [0, 0, 1, 1], [], []>} : vector<8x128xbf16>, vector<128x128xbf16>, vector<8x128xf32> -> vector<8x128xf32>
    %c0_6 = arith.constant 0 : index
    %c0_7 = arith.constant 0 : index
    %4 = vector.load %arg4[%c0_6, %c0_7] : memref<1x128xf32, #tpu.memory_space<vmem>>, vector<1x128xf32>
    %5 = vector.broadcast %4 : vector<1x128xf32> to vector<8x128xf32>
    %6 = arith.addf %3, %5 : vector<8x128xf32>
    %7 = vector.shape_cast %0 : vector<8x16x128xbf16> to vector<128x128xbf16>
    %c0_8 = arith.constant 0 : index
    %c0_9 = arith.constant 0 : index
    %8 = vector.load %arg5[%c0_8, %c0_9] : memref<128x128xbf16, #tpu.memory_space<vmem>>, vector<128x128xbf16>
    %cst_10 = arith.constant dense<0.000000e+00> : vector<128x128xf32>
    %9 = tpu.matmul %7, %8, %cst_10 {dimension_numbers = #tpu.dot_dimension_numbers<[1], [0], [0], [1], [0, 0, 1, 1], [], []>} : vector<128x128xbf16>, vector<128x128xbf16>, vector<128x128xf32> -> vector<128x128xf32>
    %c0_11 = arith.constant 0 : index
    %c0_12 = arith.constant 0 : index
    %10 = vector.load %arg6[%c0_11, %c0_12] : memref<1x128xf32, #tpu.memory_space<vmem>>, vector<1x128xf32>
    %11 = vector.broadcast %10 : vector<1x128xf32> to vector<128x128xf32>
    %12 = arith.addf %9, %11 : vector<128x128xf32>
    %13 = vector.shape_cast %12 : vector<128x128xf32> to vector<8x16x128xf32>
    %14 = vector.shape_cast %6 : vector<8x128xf32> to vector<8x1x128xf32>
    %15 = vector.broadcast %14 : vector<8x1x128xf32> to vector<8x16x128xf32>
    %16 = arith.addf %13, %15 : vector<8x16x128xf32>
    %17 = math.tanh %16 : vector<8x16x128xf32>
    %c0_13 = arith.constant 0 : index
    %c0_14 = arith.constant 0 : index
    %18 = vector.load %arg7[%c0_13, %c0_14] : memref<1x128xf32, #tpu.memory_space<vmem>>, vector<1x128xf32>
    %19 = vector.shape_cast %18 : vector<1x128xf32> to vector<1x1x128xf32>
    %20 = vector.broadcast %19 : vector<1x1x128xf32> to vector<8x16x128xf32>
    %21 = arith.mulf %17, %20 : vector<8x16x128xf32>
    %cst_15 = arith.constant dense<0.000000e+00> : vector<8x16xf32>
    %22 = vector.multi_reduction <add>, %21, %cst_15 [2] : vector<8x16x128xf32> to vector<8x16xf32>
    %23 = tpu.iota {dimensions = array<i32: 1>} : vector<8x16xi32>
    %c8_i32 = arith.constant 8 : i32
    %24 = vector.broadcast %c8_i32 : i32 to vector<8x16xi32>
    %25 = arith.cmpi slt, %23, %24 : vector<8x16xi32>
    %cst_16 = arith.constant -1.000000e+30 : f32
    %26 = vector.broadcast %cst_16 : f32 to vector<8x16xf32>
    %27 = arith.select %25, %22, %26 : vector<8x16xi1>, vector<8x16xf32>
    %cst_17 = arith.constant dense<0xFF800000> : vector<8xf32>
    %28 = vector.multi_reduction <maximumf>, %27, %cst_17 [1] : vector<8x16xf32> to vector<8xf32>
    %29 = vector.shape_cast %28 : vector<8xf32> to vector<8x1xf32>
    %30 = vector.broadcast %29 : vector<8x1xf32> to vector<8x16xf32>
    %31 = arith.subf %27, %30 : vector<8x16xf32>
    %32 = math.exp %31 : vector<8x16xf32>
    %cst_18 = arith.constant dense<0.000000e+00> : vector<8xf32>
    %33 = vector.multi_reduction <add>, %32, %cst_18 [1] : vector<8x16xf32> to vector<8xf32>
    %34 = vector.shape_cast %33 : vector<8xf32> to vector<8x1xf32>
    %35 = vector.broadcast %34 : vector<8x1xf32> to vector<8x16xf32>
    %36 = arith.divf %32, %35 : vector<8x16xf32>
    %37 = vector.shape_cast %36 : vector<8x16xf32> to vector<8x16x1xf32>
    %38 = arith.extf %0 : vector<8x16x128xbf16> to vector<8x16x128xf32>
    %39 = vector.broadcast %37 : vector<8x16x1xf32> to vector<8x16x128xf32>
    %40 = arith.mulf %39, %38 : vector<8x16x128xf32>
    %cst_19 = arith.constant dense<0.000000e+00> : vector<8x128xf32>
    %41 = vector.multi_reduction <add>, %40, %cst_19 [1] : vector<8x16x128xf32> to vector<8x128xf32>
    %c0_20 = arith.constant 0 : index
    %c0_21 = arith.constant 0 : index
    %42 = vector.load %arg8[%c0_20, %c0_21] : memref<8x128xf32, #tpu.memory_space<vmem>>, vector<8x128xf32>
    tpu.vector_store %arg8[%c0_20, %c0_21], %41 {strides = array<i32>} : memref<8x128xf32, #tpu.memory_space<vmem>>, vector<8x128xf32>,
    %c0_22 = arith.constant 0 : index
    %c0_23 = arith.constant 0 : index
    %43 = vector.load %arg9[%c0_22, %c0_23] : memref<8x16xf32, #tpu.memory_space<vmem>>, vector<8x16xf32>
    tpu.vector_store %arg9[%c0_22, %c0_23], %36 {strides = array<i32>} : memref<8x16xf32, #tpu.memory_space<vmem>>, vector<8x16xf32>,
    return
  }
  func.func @transform_0(%arg0: i32) -> (i32, i32, i32) {
    %c0_i32 = arith.constant 0 : i32
    %c0_i32_0 = arith.constant 0 : i32
    %c0_i32_1 = arith.constant 0 : i32
    return %arg0, %c0_i32, %c0_i32_0 : i32, i32, i32
  }
  func.func @transform_1(%arg0: i32) -> (i32, i32) {
    %c0_i32 = arith.constant 0 : i32
    %c0_i32_0 = arith.constant 0 : i32
    return %arg0, %c0_i32 : i32, i32
  }
  func.func @transform_2(%arg0: i32) -> (i32, i32) {
    %c0_i32 = arith.constant 0 : i32
    %c0_i32_0 = arith.constant 0 : i32
    %c0_i32_1 = arith.constant 0 : i32
    return %c0_i32, %c0_i32_0 : i32, i32
  }
  func.func @transform_3(%arg0: i32) -> (i32, i32) {
    %c0_i32 = arith.constant 0 : i32
    %c0_i32_0 = arith.constant 0 : i32
    %c0_i32_1 = arith.constant 0 : i32
    return %c0_i32, %c0_i32_0 : i32, i32
  }
  func.func @transform_4(%arg0: i32) -> (i32, i32) {
    %c0_i32 = arith.constant 0 : i32
    %c0_i32_0 = arith.constant 0 : i32
    %c0_i32_1 = arith.constant 0 : i32
    return %c0_i32, %c0_i32_0 : i32, i32
  }
  func.func @transform_5(%arg0: i32) -> (i32, i32) {
    %c0_i32 = arith.constant 0 : i32
    %c0_i32_0 = arith.constant 0 : i32
    %c0_i32_1 = arith.constant 0 : i32
    return %c0_i32, %c0_i32_0 : i32, i32
  }
  func.func @transform_6(%arg0: i32) -> (i32, i32) {
    %c0_i32 = arith.constant 0 : i32
    %c0_i32_0 = arith.constant 0 : i32
    %c0_i32_1 = arith.constant 0 : i32
    return %c0_i32, %c0_i32_0 : i32, i32
  }
  func.func @transform_7(%arg0: i32) -> (i32, i32) {
    %c0_i32 = arith.constant 0 : i32
    %c0_i32_0 = arith.constant 0 : i32
    return %arg0, %c0_i32 : i32, i32
  }
  func.func @transform_8(%arg0: i32) -> (i32, i32) {
    %c0_i32 = arith.constant 0 : i32
    %c0_i32_0 = arith.constant 0 : i32
    return %arg0, %c0_i32 : i32, i32
  }
}

</mosaic_0001>

<llo_original>
// kernel: bahdanau_attention.1
$region0: #{bahdanau_attention.1}
  #allocation0 [shape = 'u32[]', space=smem, size = 0x4, offset = 0x4, fixed_abs, tag = 'smem constant byte address 0x4 - core index']
  #allocation1 [shape = 'u32[72,128]{1,0:T(1,128)}', space=vmem, size = 0x9000, scoped, tag = 'internal scratch']
  %s0 = inlined_call_operand.vmem [shape: bf16[8,16,128], index: 0, kind: input, shape index: {}]
  %s1 = inlined_call_operand.vmem [shape: bf16[8,128], index: 1, kind: input, shape index: {}]
  %s2 = inlined_call_operand.vmem [shape: bf16[128,128], index: 2, kind: input, shape index: {}]
  %s3 = inlined_call_operand.vmem [shape: f32[1,128], index: 3, kind: input, shape index: {}]
  %s4 = inlined_call_operand.vmem [shape: bf16[128,128], index: 4, kind: input, shape index: {}]
  %s5 = inlined_call_operand.vmem [shape: f32[1,128], index: 5, kind: input, shape index: {}]
  %s6 = inlined_call_operand.vmem [shape: f32[1,128], index: 6, kind: input, shape index: {}]
  %s7 = inlined_call_operand.vmem [shape: f32[8,128], index: 7, kind: output, shape index: {0}]
  %s8 = inlined_call_operand.vmem [shape: f32[8,16], index: 8, kind: output, shape index: {1}]
  %9 = xla_tuple %s7, %s8
  %s10 = sld [smem:[#allocation0]]
  $region46: #{bahdanau_attention.1} parent=0
    _
  %s12 = ssub.s32 1, %s10
  %s13 = scalar_select 0, %s12, %s10
  // Predicated region
  $region2: #{bahdanau_attention.1} parent=0 // pred_check
    _
  $region3: #{bahdanau_attention.1} parent=0 // pred_check_branch
    %15 = sbr.rel (0) target = $region5
  $region4: #{bahdanau_attention.1} parent=0 // pred_region
    _
  $region5: #{bahdanau_attention.1} parent=0 // pred_fallthru
    _
  // Predicated region
  $region6: #{bahdanau_attention.1} parent=0 // pred_check
    _
  $region7: #{bahdanau_attention.1} parent=0 // pred_check_branch
    %17 = sbr.rel (0) target = $region9
  $region8: #{bahdanau_attention.1} parent=0 // pred_region
    _
  $region9: #{bahdanau_attention.1} parent=0 // pred_fallthru
    _
  // Predicated region
  $region10: #{bahdanau_attention.1} parent=0 // pred_check
    _
  $region11: #{bahdanau_attention.1} parent=0 // pred_check_branch
    %19 = sbr.rel (0) target = $region13
  $region12: #{bahdanau_attention.1} parent=0 // pred_region
    _
  $region13: #{bahdanau_attention.1} parent=0 // pred_fallthru
    _
  // Predicated region
  $region14: #{bahdanau_attention.1} parent=0 // pred_check
    _
  $region15: #{bahdanau_attention.1} parent=0 // pred_check_branch
    %21 = sbr.rel (0) target = $region17
  $region16: #{bahdanau_attention.1} parent=0 // pred_region
    _
  $region17: #{bahdanau_attention.1} parent=0 // pred_fallthru
    _
  // Predicated region
  $region18: #{bahdanau_attention.1} parent=0 // pred_check
    _
  $region19: #{bahdanau_attention.1} parent=0 // pred_check_branch
    %23 = sbr.rel (0) target = $region21
  $region20: #{bahdanau_attention.1} parent=0 // pred_region
    _
  $region21: #{bahdanau_attention.1} parent=0 // pred_fallthru
    _
  // Predicated region
  $region22: #{bahdanau_attention.1} parent=0 // pred_check
    _
  $region23: #{bahdanau_attention.1} parent=0 // pred_check_branch
    %25 = sbr.rel (0) target = $region25
  $region24: #{bahdanau_attention.1} parent=0 // pred_region
    _
  $region25: #{bahdanau_attention.1} parent=0 // pred_fallthru
    _
  // Predicated region
  $region26: #{bahdanau_attention.1} parent=0 // pred_check
    _
  $region27: #{bahdanau_attention.1} parent=0 // pred_check_branch
    %27 = sbr.rel (0) target = $region29
  $region28: #{bahdanau_attention.1} parent=0 // pred_region
    _
  $region29: #{bahdanau_attention.1} parent=0 // pred_fallthru
    _
  %v28 = vld [vmem:[%s0] sm:$0xf]
  %v29 = vld [vmem:[%s0 + $0x4] sm:$0xf]
  %v30 = vld [vmem:[%s0 + $0x8] sm:$0xf]
  %v31 = vld [vmem:[%s0 + $0xc] sm:$0xf]
  %v32 = vld [vmem:[%s0 + $0x10] sm:$0xf]
  %v33 = vld [vmem:[%s0 + $0x14] sm:$0xf]
  %v34 = vld [vmem:[%s0 + $0x18] sm:$0xf]
  %v35 = vld [vmem:[%s0 + $0x1c] sm:$0xf]
  %v36 = vld [vmem:[%s0 + $0x20] sm:$0xf]
  %v37 = vld [vmem:[%s0 + $0x24] sm:$0xf]
  %v38 = vld [vmem:[%s0 + $0x28] sm:$0xf]
  %v39 = vld [vmem:[%s0 + $0x2c] sm:$0xf]
  %v40 = vld [vmem:[%s0 + $0x30] sm:$0xf]
  %v41 = vld [vmem:[%s0 + $0x34] sm:$0xf]
  %v42 = vld [vmem:[%s0 + $0x38] sm:$0xf]
  %v43 = vld [vmem:[%s0 + $0x3c] sm:$0xf]
  %v44 = vld [vmem:[%s1] sm:$0xf]
  %v45 = vld [vmem:[%s2] sm:$0xf]
  %v46 = vld [vmem:[%s2 + $0x4] sm:$0xf]
  %v47 = vld [vmem:[%s2 + $0x8] sm:$0xf]
  %v48 = vld [vmem:[%s2 + $0xc] sm:$0xf]
  %v49 = vld [vmem:[%s2 + $0x10] sm:$0xf]
  %v50 = vld [vmem:[%s2 + $0x14] sm:$0xf]
  %v51 = vld [vmem:[%s2 + $0x18] sm:$0xf]
  %v52 = vld [vmem:[%s2 + $0x1c] sm:$0xf]
  %v53 = vld [vmem:[%s2 + $0x20] sm:$0xf]
  %v54 = vld [vmem:[%s2 + $0x24] sm:$0xf]
  %v55 = vld [vmem:[%s2 + $0x28] sm:$0xf]
  %v56 = vld [vmem:[%s2 + $0x2c] sm:$0xf]
  %v57 = vld [vmem:[%s2 + $0x30] sm:$0xf]
  %v58 = vld [vmem:[%s2 + $0x34] sm:$0xf]
  %v59 = vld [vmem:[%s2 + $0x38] sm:$0xf]
  %v60 = vld [vmem:[%s2 + $0x3c] sm:$0xf]
  %v61 = vld [vmem:[%s3] sm:$0x1]
  %v63 = vperm.slane %v61, 0
  %v81 = vunpack.c.l.b16 %v45
  %v82 = vunpack.c.l.b16 %v46
  %v83 = vunpack.c.l.b16 %v47
  %v84 = vunpack.c.l.b16 %v48
  %v85 = vunpack.c.l.b16 %v49
  %v86 = vunpack.c.l.b16 %v50
  %v87 = vunpack.c.l.b16 %v51
  %v88 = vunpack.c.l.b16 %v52
  %v89 = vunpack.c.l.b16 %v53
  %v90 = vunpack.c.l.b16 %v54
  %v91 = vunpack.c.l.b16 %v55
  %v92 = vunpack.c.l.b16 %v56
  %v93 = vunpack.c.l.b16 %v57
  %v94 = vunpack.c.l.b16 %v58
  %v95 = vunpack.c.l.b16 %v59
  %v96 = vunpack.c.l.b16 %v60
  %v97 = vpack.c.b16 %v82, %v81
  %v98 = vpack.c.b16 %v84, %v83
  %v99 = vpack.c.b16 %v86, %v85
  %v100 = vpack.c.b16 %v88, %v87
  %v101 = vpack.c.b16 %v90, %v89
  %v102 = vpack.c.b16 %v92, %v91
  %v103 = vpack.c.b16 %v94, %v93
  %v104 = vpack.c.b16 %v96, %v95
  %113 = vmatpush.bf16.msra.mxu0 %v104
  %114 = vmatpush.bf16.msra.mxu0 %v103
  %115 = vmatpush.bf16.msra.mxu0 %v102
  %116 = vmatpush.bf16.msra.mxu0 %v101
  %117 = vmatpush.bf16.msra.mxu0 %v100
  %118 = vmatpush.bf16.msra.mxu0 %v99
  %119 = vmatpush.bf16.msra.mxu0 %v98
  %120 = vmatpush.bf16.msra.mxu0 %v97
  %121 = vmatmul.bf16.gmra.mxu0 %v44
  %v122 = vpop.f32.mrf.mxu0
  %v123 = vadd.f32 %v63, %v122
  %v124 = vpop.f32.mrf.mxu0
  %125 = vdwg.mxu0
  %v126 = vld [vmem:[%s4] sm:$0xf]
  %v127 = vld [vmem:[%s4 + $0x4] sm:$0xf]
  %v128 = vld [vmem:[%s4 + $0x8] sm:$0xf]
  %v129 = vld [vmem:[%s4 + $0xc] sm:$0xf]
  %v130 = vld [vmem:[%s4 + $0x10] sm:$0xf]
  %v131 = vld [vmem:[%s4 + $0x14] sm:$0xf]
  %v132 = vld [vmem:[%s4 + $0x18] sm:$0xf]
  %v133 = vld [vmem:[%s4 + $0x1c] sm:$0xf]
  %v134 = vld [vmem:[%s4 + $0x20] sm:$0xf]
  %v135 = vld [vmem:[%s4 + $0x24] sm:$0xf]
  %v136 = vld [vmem:[%s4 + $0x28] sm:$0xf]
  %v137 = vld [vmem:[%s4 + $0x2c] sm:$0xf]
  %v138 = vld [vmem:[%s4 + $0x30] sm:$0xf]
  %v139 = vld [vmem:[%s4 + $0x34] sm:$0xf]
  %v140 = vld [vmem:[%s4 + $0x38] sm:$0xf]
  %v141 = vld [vmem:[%s4 + $0x3c] sm:$0xf]
  %v142 = vld [vmem:[%s5] sm:$0x1]
  %v144 = vperm.slane %v142, 0
  %v162 = vunpack.c.l.b16 %v28
  %v163 = vunpack.c.l.b16 %v29
  %v164 = vunpack.c.l.b16 %v30
  %v165 = vunpack.c.l.b16 %v31
  %v166 = vunpack.c.l.b16 %v32
  %v167 = vunpack.c.l.b16 %v33
  %v168 = vunpack.c.l.b16 %v34
  %v169 = vunpack.c.l.b16 %v35
  %v170 = vunpack.c.l.b16 %v36
  %v171 = vunpack.c.l.b16 %v37
  %v172 = vunpack.c.l.b16 %v38
  %v173 = vunpack.c.l.b16 %v39
  %v174 = vunpack.c.l.b16 %v40
  %v175 = vunpack.c.l.b16 %v41
  %v176 = vunpack.c.l.b16 %v42
  %v177 = vunpack.c.l.b16 %v43
  %v178 = vpack.c.b16 %v163, %v162
  %v179 = vpack.c.b16 %v165, %v164
  %v180 = vpack.c.b16 %v167, %v166
  %v181 = vpack.c.b16 %v169, %v168
  %v182 = vpack.c.b16 %v171, %v170
  %v183 = vpack.c.b16 %v173, %v172
  %v184 = vpack.c.b16 %v175, %v174
  %v185 = vpack.c.b16 %v177, %v176
  %v210 = vunpack.c.l.b16 %v126
  %v211 = vunpack.c.l.b16 %v127
  %v212 = vunpack.c.l.b16 %v128
  %v213 = vunpack.c.l.b16 %v129
  %v214 = vunpack.c.l.b16 %v130
  %v215 = vunpack.c.l.b16 %v131
  %v216 = vunpack.c.l.b16 %v132
  %v217 = vunpack.c.l.b16 %v133
  %v218 = vunpack.c.l.b16 %v134
  %v219 = vunpack.c.l.b16 %v135
  %v220 = vunpack.c.l.b16 %v136
  %v221 = vunpack.c.l.b16 %v137
  %v222 = vunpack.c.l.b16 %v138
  %v223 = vunpack.c.l.b16 %v139
  %v224 = vunpack.c.l.b16 %v140
  %v225 = vunpack.c.l.b16 %v141
  %v226 = vpack.c.b16 %v211, %v210
  %v227 = vpack.c.b16 %v213, %v212
  %v228 = vpack.c.b16 %v215, %v214
  %v229 = vpack.c.b16 %v217, %v216
  %v230 = vpack.c.b16 %v219, %v218
  %v231 = vpack.c.b16 %v221, %v220
  %v232 = vpack.c.b16 %v223, %v222
  %v233 = vpack.c.b16 %v225, %v224
  %242 = vmatpush.bf16.msra.mxu0 %v233
  %243 = vmatpush.bf16.msra.mxu0 %v232
  %244 = vmatpush.bf16.msra.mxu0 %v231
  %245 = vmatpush.bf16.msra.mxu0 %v230
  %246 = vmatpush.bf16.msra.mxu0 %v229
  %247 = vmatpush.bf16.msra.mxu0 %v228
  %248 = vmatpush.bf16.msra.mxu0 %v227
  %249 = vmatpush.bf16.msra.mxu0 %v226
  %250 = vmatmul.bf16.gmra.mxu0 %v178
  %v251 = vpop.f32.mrf.mxu0
  %v252 = vadd.f32 %v144, %v251
  %v253 = vpop.f32.mrf.mxu0
  %v254 = vadd.f32 %v144, %v253
  %255 = vmatmul.bf16.gmra.mxu0 %v179
  %v256 = vpop.f32.mrf.mxu0
  %v257 = vadd.f32 %v144, %v256
  %v258 = vpop.f32.mrf.mxu0
  %v259 = vadd.f32 %v144, %v258
  %260 = vmatmul.bf16.gmra.mxu0 %v180
  %v261 = vpop.f32.mrf.mxu0
  %v262 = vadd.f32 %v144, %v261
  %v263 = vpop.f32.mrf.mxu0
  %v264 = vadd.f32 %v144, %v263
  %265 = vmatmul.bf16.gmra.mxu0 %v181
  %v266 = vpop.f32.mrf.mxu0
  %v267 = vadd.f32 %v144, %v266
  %v268 = vpop.f32.mrf.mxu0
  %v269 = vadd.f32 %v144, %v268
  %270 = vmatmul.bf16.gmra.mxu0 %v182
  %v271 = vpop.f32.mrf.mxu0
  %v272 = vadd.f32 %v144, %v271
  %v273 = vpop.f32.mrf.mxu0
  %v274 = vadd.f32 %v144, %v273
  %275 = vmatmul.bf16.gmra.mxu0 %v183
  %v276 = vpop.f32.mrf.mxu0
  %v277 = vadd.f32 %v144, %v276
  %v278 = vpop.f32.mrf.mxu0
  %v279 = vadd.f32 %v144, %v278
  %280 = vmatmul.bf16.gmra.mxu0 %v184
  %v281 = vpop.f32.mrf.mxu0
  %v282 = vadd.f32 %v144, %v281
  %v283 = vpop.f32.mrf.mxu0
  %v284 = vadd.f32 %v144, %v283
  %285 = vmatmul.bf16.gmra.mxu0 %v185
  %v286 = vpop.f32.mrf.mxu0
  %v287 = vadd.f32 %v144, %v286
  %v288 = vpop.f32.mrf.mxu0
  %v289 = vadd.f32 %v144, %v288
  %290 = vdwg.mxu0
  %v292 = vrot.slane %v123, 1
  %v293 = vrot.slane %v123, 2
  %v294 = vrot.slane %v123, 3
  %v295 = vrot.slane %v123, 4
  %v296 = vrot.slane %v123, 5
  %v297 = vrot.slane %v123, 6
  %v298 = vrot.slane %v123, 7
  %v299 = vperm.slane %v123, 0
  %v300 = vperm.slane %v292, 0
  %v301 = vperm.slane %v293, 0
  %v302 = vperm.slane %v294, 0
  %v303 = vperm.slane %v295, 0
  %v304 = vperm.slane %v296, 0
  %v305 = vperm.slane %v297, 0
  %v306 = vperm.slane %v298, 0
  %v315 = vadd.f32 %v252, %v299
  %v316 = vadd.f32 %v254, %v299
  %v317 = vadd.f32 %v257, %v300
  %v318 = vadd.f32 %v259, %v300
  %v319 = vadd.f32 %v262, %v301
  %v320 = vadd.f32 %v264, %v301
  %v321 = vadd.f32 %v267, %v302
  %v322 = vadd.f32 %v269, %v302
  %v323 = vadd.f32 %v272, %v303
  %v324 = vadd.f32 %v274, %v303
  %v325 = vadd.f32 %v277, %v304
  %v326 = vadd.f32 %v279, %v304
  %v327 = vadd.f32 %v282, %v305
  %v328 = vadd.f32 %v284, %v305
  %v329 = vadd.f32 %v287, %v306
  %v330 = vadd.f32 %v289, %v306
  %v331 = vtanh.pop %v315
  %v332 = vtanh.pop %v316
  %v333 = vtanh.pop %v317
  %v334 = vtanh.pop %v318
  %v335 = vtanh.pop %v319
  %v336 = vtanh.pop %v320
  %v337 = vtanh.pop %v321
  %v338 = vtanh.pop %v322
  %v339 = vtanh.pop %v323
  %v340 = vtanh.pop %v324
  %v341 = vtanh.pop %v325
  %v342 = vtanh.pop %v326
  %v343 = vtanh.pop %v327
  %v344 = vtanh.pop %v328
  %v345 = vtanh.pop %v329
  %v346 = vtanh.pop %v330
  %v347 = vld [vmem:[%s6] sm:$0x1]
  %v349 = vperm.slane %v347, 0
  %v351 = vmul.f32 %v331, %v349
  %v352 = vmul.f32 %v332, %v349
  %v353 = vmul.f32 %v333, %v349
  %v354 = vmul.f32 %v334, %v349
  %v355 = vmul.f32 %v335, %v349
  %v356 = vmul.f32 %v336, %v349
  %v357 = vmul.f32 %v337, %v349
  %v358 = vmul.f32 %v338, %v349
  %v359 = vmul.f32 %v339, %v349
  %v360 = vmul.f32 %v340, %v349
  %v361 = vmul.f32 %v341, %v349
  %v362 = vmul.f32 %v342, %v349
  %v363 = vmul.f32 %v343, %v349
  %v364 = vmul.f32 %v344, %v349
  %v365 = vmul.f32 %v345, %v349
  %v366 = vmul.f32 %v346, %v349
  %367 = vadd.xlane.f32.xlu0 %v351
  %v368 = vpop.xlane.xlu0 %367
  %369 = vadd.xlane.f32.xlu0 %v352
  %v370 = vpop.xlane.xlu0 %369
  %371 = vadd.xlane.f32.xlu0 %v353
  %v372 = vpop.xlane.xlu0 %371
  %373 = vadd.xlane.f32.xlu0 %v354
  %v374 = vpop.xlane.xlu0 %373
  %375 = vadd.xlane.f32.xlu0 %v355
  %v376 = vpop.xlane.xlu0 %375
  %377 = vadd.xlane.f32.xlu0 %v356
  %v378 = vpop.xlane.xlu0 %377
  %379 = vadd.xlane.f32.xlu0 %v357
  %v380 = vpop.xlane.xlu0 %379
  %381 = vadd.xlane.f32.xlu0 %v358
  %v382 = vpop.xlane.xlu0 %381
  %383 = vadd.xlane.f32.xlu0 %v359
  %v384 = vpop.xlane.xlu0 %383
  %385 = vadd.xlane.f32.xlu0 %v360
  %v386 = vpop.xlane.xlu0 %385
  %387 = vadd.xlane.f32.xlu0 %v361
  %v388 = vpop.xlane.xlu0 %387
  %389 = vadd.xlane.f32.xlu0 %v362
  %v390 = vpop.xlane.xlu0 %389
  %391 = vadd.xlane.f32.xlu0 %v363
  %v392 = vpop.xlane.xlu0 %391
  %393 = vadd.xlane.f32.xlu0 %v364
  %v394 = vpop.xlane.xlu0 %393
  %395 = vadd.xlane.f32.xlu0 %v365
  %v396 = vpop.xlane.xlu0 %395
  %397 = vadd.xlane.f32.xlu0 %v366
  %v398 = vpop.xlane.xlu0 %397
  %v399 = vlaneseq
  %v400 = vand.u32 %v399, 127
  %vm401 = vcmp.lt.s32.totalorder %v400, 8
  %v418 = vperm.slane %v368, %v400
  %v419 = vadd.s32 %v400, 4294967288
  %v420 = vperm.slane %v370, %v419
  %vm421 = vcmask 130112
  %v422 = vsel %vm421, %v420, %v418
  %v423 = vperm.slane %v372, %v400
  %v424 = vperm.slane %v374, %v419
  %v425 = vsel %vm421, %v424, %v423
  %v426 = vperm.slane %v376, %v400
  %v427 = vperm.slane %v378, %v419
  %v428 = vsel %vm421, %v427, %v426
  %v429 = vperm.slane %v380, %v400
  %v430 = vperm.slane %v382, %v419
  %v431 = vsel %vm421, %v430, %v429
  %v432 = vperm.slane %v384, %v400
  %v433 = vperm.slane %v386, %v419
  %v434 = vsel %vm421, %v433, %v432
  %v435 = vperm.slane %v388, %v400
  %v436 = vperm.slane %v390, %v419
  %v437 = vsel %vm421, %v436, %v435
  %v438 = vperm.slane %v392, %v400
  %v439 = vperm.slane %v394, %v419
  %v440 = vsel %vm421, %v439, %v438
  %v441 = vperm.slane %v396, %v400
  %v442 = vperm.slane %v398, %v419
  %v443 = vsel %vm421, %v442, %v441
  %vm444 = vcmask 1041409
  %v445 = vsel %vm444, %v425, %v422
  %vm446 = vcmask 1042434
  %v447 = vsel %vm446, %v428, %v445
  %vm448 = vcmask 1043459
  %v449 = vsel %vm448, %v431, %v447
  %vm450 = vcmask 1044484
  %v451 = vsel %vm450, %v434, %v449
  %vm452 = vcmask 1045509
  %v453 = vsel %vm452, %v437, %v451
  %vm454 = vcmask 1046534
  %v455 = vsel %vm454, %v440, %v453
  %vm456 = vcmask 1047559
  %v457 = vsel %vm456, %v443, %v455
  %v459 = vsel %vm401, %v457, -1e+30
  %vm460 = vcmask 130048
  %v461 = vsel %vm460, %v459, -inf
  %462 = vmax.xlane.f32.xlu0 %v461
  %v463 = vpop.xlane.xlu0 %462
  %v464 = vsub.f32 %v459, %v463
  %v465 = vmul.f32 %v464, 1.442695
  %v466 = vpow.pop %v465
  %v467 = vsel %vm460, %v466, 0.0
  %468 = vadd.xlane.f32.xlu0 %v467
  %v469 = vpop.xlane.xlu0 %468
  %v470 = vrcp.pop %v469
  %v471 = vmul.f32 %v469, %v470
  %v472 = vsub.f32 1.0, %v471
  %v473 = vmul.f32 %v470, %v472
  %v474 = vadd.f32 %v470, %v473
  %vm475 = vweird.f32 %v469
  %vm476 = vweird.f32 %v470
  %vm477 = vmor %vm475, %vm476
  %v478 = vsel %vm477, %v470, %v474
  %v479 = vand.u32 2147483647, %v469
  %vm480 = vcmp.eq.f32.partialorder %v479, 8.507059e+37
  %v481 = vand.u32 %v469, 2147483648
  %v482 = vor.u32 1.1754944e-38, %v481
  %v483 = vsel %vm480, %v482, %v478
  %v484 = vmul.f32 %v466, %v483
  %v485 = vperm.slane %v484, 0
  %v486 = vlaneseq
  %v487 = vshrl.u32 %v486, 7
  %489 = vset.pattern.permute.xlu0 %v487
  %490 = vperm.xlu0 %489, %v485
  %v491 = vpop.permute.xlu0 %490
  %v492 = vlaneseq
  %v493 = vshrl.u32 %v492, 7
  %v494 = vadd.s32 %v493, 8
  %495 = vset.pattern.permute.xlu0 %v494
  %496 = vperm.xlu0 %495, %v485
  %v497 = vpop.permute.xlu0 %496
  %v498 = vperm.slane %v484, 1
  %v499 = vlaneseq
  %v500 = vshrl.u32 %v499, 7
  %502 = vset.pattern.permute.xlu0 %v500
  %503 = vperm.xlu0 %502, %v498
  %v504 = vpop.permute.xlu0 %503
  %v505 = vlaneseq
  %v506 = vshrl.u32 %v505, 7
  %v507 = vadd.s32 %v506, 8
  %508 = vset.pattern.permute.xlu0 %v507
  %509 = vperm.xlu0 %508, %v498
  %v510 = vpop.permute.xlu0 %509
  %v511 = vperm.slane %v484, 2
  %v512 = vlaneseq
  %v513 = vshrl.u32 %v512, 7
  %515 = vset.pattern.permute.xlu0 %v513
  %516 = vperm.xlu0 %515, %v511
  %v517 = vpop.permute.xlu0 %516
  %v518 = vlaneseq
  %v519 = vshrl.u32 %v518, 7
  %v520 = vadd.s32 %v519, 8
  %521 = vset.pattern.permute.xlu0 %v520
  %522 = vperm.xlu0 %521, %v511
  %v523 = vpop.permute.xlu0 %522
  %v524 = vperm.slane %v484, 3
  %v525 = vlaneseq
  %v526 = vshrl.u32 %v525, 7
  %528 = vset.pattern.permute.xlu0 %v526
  %529 = vperm.xlu0 %528, %v524
  %v530 = vpop.permute.xlu0 %529
  %v531 = vlaneseq
  %v532 = vshrl.u32 %v531, 7
  %v533 = vadd.s32 %v532, 8
  %534 = vset.pattern.permute.xlu0 %v533
  %535 = vperm.xlu0 %534, %v524
  %v536 = vpop.permute.xlu0 %535
  %v537 = vperm.slane %v484, 4
  %v538 = vlaneseq
  %v539 = vshrl.u32 %v538, 7
  %541 = vset.pattern.permute.xlu0 %v539
  %542 = vperm.xlu0 %541, %v537
  %v543 = vpop.permute.xlu0 %542
  %v544 = vlaneseq
  %v545 = vshrl.u32 %v544, 7
  %v546 = vadd.s32 %v545, 8
  %547 = vset.pattern.permute.xlu0 %v546
  %548 = vperm.xlu0 %547, %v537
  %v549 = vpop.permute.xlu0 %548
  %v550 = vperm.slane %v484, 5
  %v551 = vlaneseq
  %v552 = vshrl.u32 %v551, 7
  %554 = vset.pattern.permute.xlu0 %v552
  %555 = vperm.xlu0 %554, %v550
  %v556 = vpop.permute.xlu0 %555
  %v557 = vlaneseq
  %v558 = vshrl.u32 %v557, 7
  %v559 = vadd.s32 %v558, 8
  %560 = vset.pattern.permute.xlu0 %v559
  %561 = vperm.xlu0 %560, %v550
  %v562 = vpop.permute.xlu0 %561
  %v563 = vperm.slane %v484, 6
  %v564 = vlaneseq
  %v565 = vshrl.u32 %v564, 7
  %567 = vset.pattern.permute.xlu0 %v565
  %568 = vperm.xlu0 %567, %v563
  %v569 = vpop.permute.xlu0 %568
  %v570 = vlaneseq
  %v571 = vshrl.u32 %v570, 7
  %v572 = vadd.s32 %v571, 8
  %573 = vset.pattern.permute.xlu0 %v572
  %574 = vperm.xlu0 %573, %v563
  %v575 = vpop.permute.xlu0 %574
  %v576 = vperm.slane %v484, 7
  %v577 = vlaneseq
  %v578 = vshrl.u32 %v577, 7
  %580 = vset.pattern.permute.xlu0 %v578
  %581 = vperm.xlu0 %580, %v576
  %v582 = vpop.permute.xlu0 %581
  %v583 = vlaneseq
  %v584 = vshrl.u32 %v583, 7
  %v585 = vadd.s32 %v584, 8
  %586 = vset.pattern.permute.xlu0 %v585
  %587 = vperm.xlu0 %586, %v576
  %v588 = vpop.permute.xlu0 %587
  %v589 = vunpack.c.l.bf16 %v28
  %v590 = vunpack.c.l.bf16 %v29
  %v591 = vunpack.c.l.bf16 %v30
  %v592 = vunpack.c.l.bf16 %v31
  %v593 = vunpack.c.l.bf16 %v32
  %v594 = vunpack.c.l.bf16 %v33
  %v595 = vunpack.c.l.bf16 %v34
  %v596 = vunpack.c.l.bf16 %v35
  %v597 = vunpack.c.l.bf16 %v36
  %v598 = vunpack.c.l.bf16 %v37
  %v599 = vunpack.c.l.bf16 %v38
  %v600 = vunpack.c.l.bf16 %v39
  %v601 = vunpack.c.l.bf16 %v40
  %v602 = vunpack.c.l.bf16 %v41
  %v603 = vunpack.c.l.bf16 %v42
  %v604 = vunpack.c.l.bf16 %v43
  %v605 = vmul.f32 %v491, %v589
  %v606 = vmul.f32 %v497, %v590
  %v607 = vmul.f32 %v504, %v591
  %v608 = vmul.f32 %v510, %v592
  %v609 = vmul.f32 %v517, %v593
  %v610 = vmul.f32 %v523, %v594
  %v611 = vmul.f32 %v530, %v595
  %v612 = vmul.f32 %v536, %v596
  %v613 = vmul.f32 %v543, %v597
  %v614 = vmul.f32 %v549, %v598
  %v615 = vmul.f32 %v556, %v599
  %v616 = vmul.f32 %v562, %v600
  %v617 = vmul.f32 %v569, %v601
  %v618 = vmul.f32 %v575, %v602
  %v619 = vmul.f32 %v582, %v603
  %v620 = vmul.f32 %v588, %v604
  %v621 = vadd.f32 %v605, %v606
  %v622 = vrot.slane %v621, 4
  %v623 = vadd.f32 %v621, %v622
  %v624 = vrot.slane %v623, 2
  %v625 = vadd.f32 %v623, %v624
  %v626 = vrot.slane %v625, 1
  %v627 = vadd.f32 %v625, %v626
  %v628 = vadd.f32 %v607, %v608
  %v629 = vrot.slane %v628, 4
  %v630 = vadd.f32 %v628, %v629
  %v631 = vrot.slane %v630, 2
  %v632 = vadd.f32 %v630, %v631
  %v633 = vrot.slane %v632, 1
  %v634 = vadd.f32 %v632, %v633
  %v635 = vadd.f32 %v609, %v610
  %v636 = vrot.slane %v635, 4
  %v637 = vadd.f32 %v635, %v636
  %v638 = vrot.slane %v637, 2
  %v639 = vadd.f32 %v637, %v638
  %v640 = vrot.slane %v639, 1
  %v641 = vadd.f32 %v639, %v640
  %v642 = vadd.f32 %v611, %v612
  %v643 = vrot.slane %v642, 4
  %v644 = vadd.f32 %v642, %v643
  %v645 = vrot.slane %v644, 2
  %v646 = vadd.f32 %v644, %v645
  %v647 = vrot.slane %v646, 1
  %v648 = vadd.f32 %v646, %v647
  %v649 = vadd.f32 %v613, %v614
  %v650 = vrot.slane %v649, 4
  %v651 = vadd.f32 %v649, %v650
  %v652 = vrot.slane %v651, 2
  %v653 = vadd.f32 %v651, %v652
  %v654 = vrot.slane %v653, 1
  %v655 = vadd.f32 %v653, %v654
  %v656 = vadd.f32 %v615, %v616
  %v657 = vrot.slane %v656, 4
  %v658 = vadd.f32 %v656, %v657
  %v659 = vrot.slane %v658, 2
  %v660 = vadd.f32 %v658, %v659
  %v661 = vrot.slane %v660, 1
  %v662 = vadd.f32 %v660, %v661
  %v663 = vadd.f32 %v617, %v618
  %v664 = vrot.slane %v663, 4
  %v665 = vadd.f32 %v663, %v664
  %v666 = vrot.slane %v665, 2
  %v667 = vadd.f32 %v665, %v666
  %v668 = vrot.slane %v667, 1
  %v669 = vadd.f32 %v667, %v668
  %v670 = vadd.f32 %v619, %v620
  %v671 = vrot.slane %v670, 4
  %v672 = vadd.f32 %v670, %v671
  %v673 = vrot.slane %v672, 2
  %v674 = vadd.f32 %v672, %v673
  %v675 = vrot.slane %v674, 1
  %v676 = vadd.f32 %v674, %v675
  %v685 = vsel %vm444, %v634, %v627
  %v686 = vsel %vm446, %v641, %v685
  %v687 = vsel %vm448, %v648, %v686
  %v688 = vsel %vm450, %v655, %v687
  %v689 = vsel %vm452, %v662, %v688
  %v690 = vsel %vm454, %v669, %v689
  %v691 = vsel %vm456, %v676, %v690
  %693 = vst [vmem:[%s7] sm:$0xff] %v691
  %694 = vst.msk [vmem:[%s8] sm:$0xff] %vm460, %v484
  // Predicated region
  $region30: #{bahdanau_attention.1} parent=0 // pred_check
    _
  $region31: #{bahdanau_attention.1} parent=0 // pred_check_branch
    %696 = sbr.rel (0) target = $region33
  $region32: #{bahdanau_attention.1} parent=0 // pred_region
    _
  $region33: #{bahdanau_attention.1} parent=0 // pred_fallthru
    _
  // Predicated region
  $region34: #{bahdanau_attention.1} parent=0 // pred_check
    _
  $region35: #{bahdanau_attention.1} parent=0 // pred_check_branch
    %698 = sbr.rel (0) target = $region37
  $region36: #{bahdanau_attention.1} parent=0 // pred_region
    _
  $region37: #{bahdanau_attention.1} parent=0 // pred_fallthru
    _
  // Predicated region
  $region38: #{bahdanau_attention.1} parent=0 // pred_check
    _
  $region39: #{bahdanau_attention.1} parent=0 // pred_check_branch
    %700 = sbr.rel (0) target = $region41
  $region40: #{bahdanau_attention.1} parent=0 // pred_region
    _
  $region41: #{bahdanau_attention.1} parent=0 // pred_fallthru
    _
  // Predicated region
  $region42: #{bahdanau_attention.1} parent=0 // pred_check
    _
  $region43: #{bahdanau_attention.1} parent=0 // pred_check_branch
    %702 = sbr.rel (0) target = $region45
  $region44: #{bahdanau_attention.1} parent=0 // pred_region
    _
  $region45: #{bahdanau_attention.1} parent=0 // pred_fallthru
    _

</llo_original>
